<compile_context>
chip_gen: v7x
topology: tpu7x:2x2x1
jax: 0.10.0
libtpu: 0.0.40
codegen_flags: <defaults>
</compile_context>

<pallas_src>
import math

import numpy as np
import jax
import jax.numpy as jnp
from jax.experimental import pallas as pl
from jax.experimental.pallas import tpu as pltpu


def make_upsample_matrix(in_size: int, factor: int) -> np.ndarray:
    """1-D transposed-conv-as-matrix for the bilinear filter of size 2*factor.

    U[o, i] = filter_1d[o - i*factor] when 0 <= o - i*factor < 2*factor else 0,
    filter_1d[k] = 1 - |k - center| / factor, center = factor - 0.5
    (kernel size 2*factor is always even; matches get_upsample_filter).
    """
    out_size = (in_size + 1) * factor  # (in_size - 1)*factor + 2*factor
    center = factor - 0.5
    o = np.arange(out_size)[:, None].astype(np.float32)
    i = np.arange(in_size)[None, :].astype(np.float32)
    k = o - i * factor
    vals = 1.0 - np.abs(k - center) / float(factor)
    return np.maximum(vals, 0.0).astype(np.float32)


def bilinear_kernel(x_ref, uht_ref, uwt_ref, o_ref):
    # x_ref:   (CB, H, W)         input planes (x.dtype)
    # uht_ref: (H, H_out)         U_h^T (x.dtype)
    # uwt_ref: (W, W_out)         U_w^T (f32)
    # o_ref:   (CB*H_out, W_out)  output planes, row-major per channel
    cb, h, w = x_ref.shape
    h_out = uht_ref.shape[1]

    x = x_ref[...]                                           # (CB, H, W)

    # --- H-pass: one MXU matmul with M = CB*W --------------------------------
    xt = jnp.swapaxes(x, 1, 2)                               # (CB, W, H)  XLU
    xh = jnp.dot(xt.reshape(cb * w, h), uht_ref[...],
                 preferred_element_type=jnp.float32)         # (CB*W, H_out) f32

    # Back to (CB, H_out, W) for the W-pass (intermediate stays f32).
    xh = jnp.swapaxes(xh.reshape(cb, w, h_out), 1, 2)        # (CB, H_out, W) f32

    # --- W-pass: one MXU matmul with M = CB*H_out -----------------------------
    out = jnp.dot(xh.reshape(cb * h_out, w), uwt_ref[...],
                  preferred_element_type=jnp.float32)        # (CB*H_out, W_out)

    o_ref[...] = out.astype(o_ref.dtype)


def _vmem_capacity_bytes() -> int:
    try:
        info = pltpu.get_tpu_info()
        cap = getattr(info, "vmem_capacity_bytes", None)
        if cap:
            return int(cap)
    except Exception:
        pass
    return 64 * 1024 * 1024   # conservative fallback (v7x per-TC VMEM)


def _pick_channel_block(nc, h, w, h_out, w_out, itemsize, budget_bytes):
    """Channel-block size whose *padded* per-step VMEM working set fits budget."""
    lane = 128
    sub = 8 * max(1, 4 // itemsize)      # sublane tile: f32 -> 8, bf16 -> 16

    def pad_up(n, m):
        return -(-n // m) * m

    # Padded per-channel footprint of one grid step (bytes): double-buffered
    # input/output tiles + the f32 intermediates of the two-pass compute.
    in_tile   = pad_up(h, sub) * pad_up(w, lane) * itemsize        # (CB,H,W)
    out_tile  = pad_up(h_out, 8) * pad_up(w_out, lane) * itemsize  # (CB*H_out,W_out)
    xt_tile   = pad_up(w, sub) * pad_up(h, lane) * itemsize        # (CB,W,H)
    xh_tile   = pad_up(w, 8) * pad_up(h_out, lane) * 4             # (CB*W,H_out) f32
    xh_t_tile = pad_up(h_out, 8) * pad_up(w, lane) * 4             # (CB,H_out,W) f32
    acc_tile  = pad_up(h_out, 8) * pad_up(w_out, lane) * 4         # (CB*H_out,W_out) f32
    per_cb = 2 * in_tile + 2 * out_tile + xt_tile + xh_tile + xh_t_tile + acc_tile

    cap = max(1, int(budget_bytes) // per_cb)
    cap = min(cap, nc)
    if nc >= 2:
        # Keep at least 2 grid steps so the "parallel" axis can shard across
        # TensorCores (v7x megacore); one extra ~0.35us step is negligible.
        cap = min(cap, -(-nc // 2))

    # The output block (CB*H_out, W_out) needs its sublane extent to be a
    # multiple of the tile (or equal the full array); round CB accordingly.
    cb_align = sub // math.gcd(h_out, sub)
    cb = max(cb_align, (cap // cb_align) * cb_align)
    if cb >= nc:
        return nc                       # single block == full array dims
    if nc % cb != 0:
        # Prefer a CB that divides NC (avoids channel padding) if it does not
        # cost more than ~2x in block size.
        for cand in range(cb, 0, -cb_align):
            if cand >= max(cb_align, cb // 2) and nc % cand == 0:
                return cand
    return cb


def bilinear_upsample(x: jax.Array, factor: int) -> jax.Array:
    """Equivalent of Bilinear(factor, C)(x) for x of shape (N, C, H, W)."""
    N, C, H, W = x.shape
    H_out = (H + 1) * factor
    W_out = (W + 1) * factor
    NC = N * C
    itemsize = jnp.dtype(x.dtype).itemsize

    # U_h^T follows x.dtype (bf16 inputs keep the fast MXU path on the big
    # first matmul); U_w^T stays f32 since the second pass runs on the f32
    # intermediate.  Note: bilinear taps are exact in bf16 only for power-of-2
    # factors.
    u_hT = jnp.asarray(make_upsample_matrix(H, factor).T, dtype=x.dtype)      # (H, H_out)
    u_wT = jnp.asarray(make_upsample_matrix(W, factor).T, dtype=jnp.float32)  # (W, W_out)

    vmem_cap = _vmem_capacity_bytes()
    vmem_limit = int(min((vmem_cap * 3) // 4, 100 * 1024 * 1024))
    CB = _pick_channel_block(NC, H, W, H_out, W_out, itemsize,
                             budget_bytes=vmem_limit // 2)

    grid = pl.cdiv(NC, CB)
    NC_pad = grid * CB

    x_flat = x.reshape(NC, H, W)                      # free row-major reshape
    if NC_pad != NC:
        x_flat = jnp.pad(x_flat, ((0, NC_pad - NC), (0, 0), (0, 0)))

    out2d = pl.pallas_call(
        bilinear_kernel,
        out_shape=jax.ShapeDtypeStruct((NC_pad * H_out, W_out), x.dtype),
        grid_spec=pltpu.PrefetchScalarGridSpec(
            num_scalar_prefetch=0,
            grid=(grid,),
            in_specs=[
                pl.BlockSpec((CB, H, W), lambda i: (i, 0, 0)),
                pl.BlockSpec((H, H_out), lambda i: (0, 0)),
                pl.BlockSpec((W, W_out), lambda i: (0, 0)),
            ],
            out_specs=pl.BlockSpec((CB * H_out, W_out), lambda i: (i, 0)),
        ),
        compiler_params=pltpu.CompilerParams(
            dimension_semantics=("parallel",),
            vmem_limit_bytes=vmem_limit,
        ),
    )(x_flat, u_hT, u_wT)

    out = out2d.reshape(NC_pad, H_out, W_out)         # free row-major reshape
    if NC_pad != NC:
        out = out[:NC]
    return out.reshape(N, C, H_out, W_out)


def _reference_numpy(x: np.ndarray, factor: int) -> np.ndarray:
    """Direct scatter implementation of conv_transpose2d with the diagonal
    bilinear weight (stride=factor, kernel=2*factor), for verification."""
    N, C, H, W = x.shape
    size = 2 * factor
    center = factor - 0.5
    og0 = np.arange(size)[:, None]
    og1 = np.arange(size)[None, :]
    filt = ((1 - np.abs(og0 - center) / factor)
            * (1 - np.abs(og1 - center) / factor)).astype(np.float32)
    H_out = (H - 1) * factor + size
    W_out = (W - 1) * factor + size
    out = np.zeros((N, C, H_out, W_out), dtype=np.float32)
    for n in range(N):
        for c in range(C):
            for ih in range(H):
                for iw in range(W):
                    out[n, c,
                        ih * factor:ih * factor + size,
                        iw * factor:iw * factor + size] += x[n, c, ih, iw] * filt
    return out


if __name__ == "__main__":
    key = jax.random.PRNGKey(0)
    N, C, H, W = 2, 4, 16, 16
    factor = 2

    x = jax.random.normal(key, (N, C, H, W), dtype=jnp.float32)

    y = bilinear_upsample(x, factor)
    y = jax.block_until_ready(y)

    y_ref = _reference_numpy(np.asarray(x), factor)
    assert y.shape == y_ref.shape, (y.shape, y_ref.shape)
    np.testing.assert_allclose(np.asarray(y), y_ref, rtol=1e-5, atol=1e-5)

    print("KERNEL_OK")
</pallas_src>

<mosaic_0001>
module attributes {stable_mosaic.version = 11 : i64} {
  func.func @bilinear_kernel(%arg0: i32, %arg1: memref<4x16x16xf32, #tpu.memory_space<vmem>>, %arg2: memref<16x34xf32, #tpu.memory_space<vmem>>, %arg3: memref<16x34xf32, #tpu.memory_space<vmem>>, %arg4: memref<136x34xf32, #tpu.memory_space<vmem>>) attributes {dimension_semantics = [#tpu.dimension_semantics<parallel>], iteration_bounds = array<i64: 2>, scalar_prefetch = 0 : i64, scratch_operands = 0 : i64, tpu.core_type = #tpu.core_type<tc>, window_params = [{transform_indices = @transform_0, window_bounds = array<i64: 4, 16, 16>}, {pipeline_mode = #tpu.pipeline_mode<synchronous>, transform_indices = @transform_1, window_bounds = array<i64: 16, 34>}, {pipeline_mode = #tpu.pipeline_mode<synchronous>, transform_indices = @transform_2, window_bounds = array<i64: 16, 34>}, {transform_indices = @transform_3, window_bounds = array<i64: 136, 34>}]} {
    %c0 = arith.constant 0 : index
    %c0_0 = arith.constant 0 : index
    %c0_1 = arith.constant 0 : index
    %0 = vector.load %arg1[%c0, %c0_0, %c0_1] : memref<4x16x16xf32, #tpu.memory_space<vmem>>, vector<4x16x16xf32>
    %1 = tpu.transpose %0, [0, 2, 1] : vector<4x16x16xf32> -> vector<4x16x16xf32>
    %2 = vector.shape_cast %1 : vector<4x16x16xf32> to vector<64x16xf32>
    %c0_2 = arith.constant 0 : index
    %c0_3 = arith.constant 0 : index
    %3 = vector.load %arg2[%c0_2, %c0_3] : memref<16x34xf32, #tpu.memory_space<vmem>>, vector<16x34xf32>
    %cst = arith.constant dense<0.000000e+00> : vector<64x34xf32>
    %4 = tpu.matmul %2, %3, %cst {dimension_numbers = #tpu.dot_dimension_numbers<[1], [0], [0], [1], [0, 0, 1, 1], [], []>} : vector<64x16xf32>, vector<16x34xf32>, vector<64x34xf32> -> vector<64x34xf32>
    %5 = vector.shape_cast %4 : vector<64x34xf32> to vector<4x16x34xf32>
    %6 = tpu.transpose %5, [0, 2, 1] : vector<4x16x34xf32> -> vector<4x34x16xf32>
    %7 = vector.shape_cast %6 : vector<4x34x16xf32> to vector<136x16xf32>
    %c0_4 = arith.constant 0 : index
    %c0_5 = arith.constant 0 : index
    %8 = vector.load %arg3[%c0_4, %c0_5] : memref<16x34xf32, #tpu.memory_space<vmem>>, vector<16x34xf32>
    %cst_6 = arith.constant dense<0.000000e+00> : vector<136x34xf32>
    %9 = tpu.matmul %7, %8, %cst_6 {dimension_numbers = #tpu.dot_dimension_numbers<[1], [0], [0], [1], [0, 0, 1, 1], [], []>} : vector<136x16xf32>, vector<16x34xf32>, vector<136x34xf32> -> vector<136x34xf32>
    %c0_7 = arith.constant 0 : index
    %c0_8 = arith.constant 0 : index
    %10 = vector.load %arg4[%c0_7, %c0_8] : memref<136x34xf32, #tpu.memory_space<vmem>>, vector<136x34xf32>
    tpu.vector_store %arg4[%c0_7, %c0_8], %9 {strides = array<i32>} : memref<136x34xf32, #tpu.memory_space<vmem>>, vector<136x34xf32>,
    return
  }
  func.func @transform_0(%arg0: i32) -> (i32, i32, i32) {
    %c0_i32 = arith.constant 0 : i32
    %c0_i32_0 = arith.constant 0 : i32
    %c0_i32_1 = arith.constant 0 : i32
    return %arg0, %c0_i32, %c0_i32_0 : i32, i32, i32
  }
  func.func @transform_1(%arg0: i32) -> (i32, i32) {
    %c0_i32 = arith.constant 0 : i32
    %c0_i32_0 = arith.constant 0 : i32
    %c0_i32_1 = arith.constant 0 : i32
    return %c0_i32, %c0_i32_0 : i32, i32
  }
  func.func @transform_2(%arg0: i32) -> (i32, i32) {
    %c0_i32 = arith.constant 0 : i32
    %c0_i32_0 = arith.constant 0 : i32
    %c0_i32_1 = arith.constant 0 : i32
    return %c0_i32, %c0_i32_0 : i32, i32
  }
  func.func @transform_3(%arg0: i32) -> (i32, i32) {
    %c0_i32 = arith.constant 0 : i32
    %c0_i32_0 = arith.constant 0 : i32
    return %arg0, %c0_i32 : i32, i32
  }
}

</mosaic_0001>

<llo_original>
// kernel: tpu_custom_call.1
$region0: #{tpu_custom_call.1}
  #allocation0 [shape = 'u32[]', space=smem, size = 0x4, offset = 0x4, fixed_abs, tag = 'smem constant byte address 0x4 - core index']
  #allocation1 [shape = 'u32[144,128]{1,0:T(1,128)}', space=vmem, size = 0x12000, scoped, tag = 'internal scratch']
  %s0 = inlined_call_operand.hbm [shape: f32[8,16,16], index: 0, kind: input, shape index: {}]
  %s1 = inlined_call_operand.hbm [shape: f32[16,34], index: 1, kind: input, shape index: {}]
  %s2 = inlined_call_operand.hbm [shape: f32[16,34], index: 2, kind: input, shape index: {}]
  %s3 = inlined_call_operand.vmem [shape: f32[272,34], index: 3, kind: output, shape index: {}]
  %s4 = sld [smem:[#allocation0]]
  $region57: #{tpu_custom_call.1} parent=0
    _
  %s6 = ssub.s32 1, %s4
  %s7 = scalar_select 0, %s6, %s4
  $region1: #{tpu_custom_call.1} parent=0
    #allocation2 [shape = 'u8[65536]{0}', space=vmem, size = 0x10000, scoped, tag = 'input window, operand 0']
    #allocation3 [shape = 's32[2]{0}', space=sflag, size = 0x8, scoped, tag = 'scoped memory for tpu_custom_call.1']
    #allocation4 [shape = 'u8[8192]{0}', space=vmem, size = 0x2000, scoped, tag = 'input window, operand 1, single buffered']
    #allocation5 [shape = 's32[1]{0}', space=sflag, size = 0x4, scoped, tag = 'scoped memory for tpu_custom_call.1']
    #allocation6 [shape = 'u8[8192]{0}', space=vmem, size = 0x2000, scoped, tag = 'input window, operand 2, single buffered']
    %8 = vsyncpa [#allocation3], 0
    %s9 = scalar_lea.sflag [#allocation3], 1
    %10 = vsyncpa %s9, 0
    %11 = vsyncpa [#allocation5], 0
    loop: start=0, step=1, limit=4
    $region2: #{tpu_custom_call.1} parent=1 // loop_pre_header
      _
    $region3: #{tpu_custom_call.1} parent=1 // loop_header
      %s13 = sphi 0, %s17
      %p14 = scmp.ge.s32.totalorder %s13, 4
      %s23 = sphi 0, %s25
      %s26 = sphi 0, %s23
      %s27 = sphi 0, %s26
      %s43 = sphi 0, %s27
      %s47 = sphi 0, %s47
      %s49 = sphi 0, %s47
      %s50 = sphi 0, %s49
      %s64 = sphi 0, %s50
      %s68 = sphi 0, %s68
      %s70 = sphi 0, %s68
      %s71 = sphi 0, %s70
      %s85 = sphi 0, %s71
      %s91 = sphi 0, %s93
      %s94 = sphi 0, %s91
      %s95 = sphi 0, %s94
      %s111 = sphi 0, %s95
    $region4: #{tpu_custom_call.1} parent=1 // loop_header_branch
      %16 = sbr.rel (%p14) target = $region8
    $region5: #{tpu_custom_call.1} parent=1 // loop_body
      %s18 = ssub.s32 %s13, 1
      %s19 = ssub.s32 %s13, 2
      %s20 = sadd.s32 %s13, 1
      %s21 = ssub.s32 %s13, %s20
      %p22 = scmp.eq.s32.totalorder %s21, 0
      %s24 = sadd.s32 %s23, 1
      %s25 = scalar_select %p22, %s23, %s24
      %p28 = pneg %p22
      %p29 = scmp.eq.s32.totalorder %s13, 1
      %p30 = por %p28, %p29
      %p31 = scmp.ne.s32.totalorder %s23, %s26
      %p32 = scmp.eq.s32.totalorder %s13, 0
      %p33 = por %p31, %p32
      %p34 = scmp.ne.s32.totalorder %s23, %s26
      %p35 = scmp.eq.s32.totalorder %s18, 1
      %p36 = por %p34, %p35
      %p37 = scmp.ne.s32.totalorder %s26, %s27
      %p38 = scmp.eq.s32.totalorder %s18, 0
      %p39 = por %p37, %p38
      %p40 = scmp.ne.s32.totalorder %s26, %s27
      %p41 = scmp.eq.s32.totalorder %s19, 1
      %p42 = por %p40, %p41
      %p44 = scmp.ne.s32.totalorder %s27, %s43
      %p45 = scmp.eq.s32.totalorder %s19, 0
      %p46 = por %p44, %p45
      %s48 = sadd.s32 %s47, 1
      %p51 = scmp.eq.s32.totalorder %s13, 1
      %p52 = scmp.ne.s32.totalorder %s47, %s49
      %p53 = scmp.eq.s32.totalorder %s13, 0
      %p54 = por %p52, %p53
      %p55 = scmp.ne.s32.totalorder %s47, %s49
      %p56 = scmp.eq.s32.totalorder %s18, 1
      %p57 = por %p55, %p56
      %p58 = scmp.ne.s32.totalorder %s49, %s50
      %p59 = scmp.eq.s32.totalorder %s18, 0
      %p60 = por %p58, %p59
      %p61 = scmp.ne.s32.totalorder %s49, %s50
      %p62 = scmp.eq.s32.totalorder %s19, 1
      %p63 = por %p61, %p62
      %p65 = scmp.ne.s32.totalorder %s50, %s64
      %p66 = scmp.eq.s32.totalorder %s19, 0
      %p67 = por %p65, %p66
      %s69 = sadd.s32 %s68, 1
      %p72 = scmp.eq.s32.totalorder %s13, 1
      %p73 = scmp.ne.s32.totalorder %s68, %s70
      %p74 = scmp.eq.s32.totalorder %s13, 0
      %p75 = por %p73, %p74
      %p76 = scmp.ne.s32.totalorder %s68, %s70
      %p77 = scmp.eq.s32.totalorder %s18, 1
      %p78 = por %p76, %p77
      %p79 = scmp.ne.s32.totalorder %s70, %s71
      %p80 = scmp.eq.s32.totalorder %s18, 0
      %p81 = por %p79, %p80
      %p82 = scmp.ne.s32.totalorder %s70, %s71
      %p83 = scmp.eq.s32.totalorder %s19, 1
      %p84 = por %p82, %p83
      %p86 = scmp.ne.s32.totalorder %s71, %s85
      %p87 = scmp.eq.s32.totalorder %s19, 0
      %p88 = por %p86, %p87
      %s89 = ssub.s32 %s13, %s20
      %p90 = scmp.eq.s32.totalorder %s89, 0
      %s92 = sadd.s32 %s91, 1
      %s93 = scalar_select %p90, %s91, %s92
      %p96 = pneg %p90
      %p97 = scmp.eq.s32.totalorder %s13, 1
      %p98 = por %p96, %p97
      %p99 = scmp.ne.s32.totalorder %s91, %s94
      %p100 = scmp.eq.s32.totalorder %s13, 0
      %p101 = por %p99, %p100
      %p102 = scmp.ne.s32.totalorder %s91, %s94
      %p103 = scmp.eq.s32.totalorder %s18, 1
      %p104 = por %p102, %p103
      %p105 = scmp.ne.s32.totalorder %s94, %s95
      %p106 = scmp.eq.s32.totalorder %s18, 0
      %p107 = por %p105, %p106
      %p108 = scmp.ne.s32.totalorder %s94, %s95
      %p109 = scmp.eq.s32.totalorder %s19, 1
      %p110 = por %p108, %p109
      %p112 = scmp.ne.s32.totalorder %s95, %s111
      %p113 = scmp.eq.s32.totalorder %s19, 0
      %p114 = por %p112, %p113
      %p115 = scmp.le.s32.totalorder 1, %s13
      %p116 = scmp.lt.s32.totalorder %s13, 3
      %p117 = pnand %p115, %p116
      %p118 = pneg %p117
      // Predicated region
      $region9: #{tpu_custom_call.1} parent=5 // pred_check
        _
      $region10: #{tpu_custom_call.1} parent=5 // pred_check_branch
        %120 = sbr.rel (%p117) target = $region12
      $region11: #{tpu_custom_call.1} parent=5 // pred_region
        %s121 = ssub.s32 %s13, 1
        // Predicated region
        $region13: #{tpu_custom_call.1} parent=11 // pred_check
          %p122 = pneg %p60
        $region14: #{tpu_custom_call.1} parent=11 // pred_check_branch
          %124 = sbr.rel (%p122) target = $region16
        $region15: #{tpu_custom_call.1} parent=11 // pred_region
          %s126 = ssub.s32 256, 256
          %127 = vsyncadd [#allocation5], %s126
          %s128 = sshll.u32 [#allocation4], 4
          %s129 = int_to_ptr.vmem [resolvable:$true] %s128
          %134 = dma.hbm_to_vmem [thread:$0]  %s1, 256, %s129, [#allocation5], 128, 128, 8
        $region16: #{tpu_custom_call.1} parent=11 // pred_fallthru
          _
        // Predicated region
        $region17: #{tpu_custom_call.1} parent=11 // pred_check
          %p135 = pneg %p81
        $region18: #{tpu_custom_call.1} parent=11 // pred_check_branch
          %137 = sbr.rel (%p135) target = $region20
        $region19: #{tpu_custom_call.1} parent=11 // pred_region
          %s139 = ssub.s32 256, 256
          %140 = vsyncadd [#allocation5], %s139
          %s141 = sshll.u32 [#allocation6], 4
          %s142 = int_to_ptr.vmem [resolvable:$true] %s141
          %147 = dma.hbm_to_vmem [thread:$0]  %s2, 256, %s142, [#allocation5], 128, 128, 8
        $region20: #{tpu_custom_call.1} parent=11 // pred_fallthru
          _
      $region12: #{tpu_custom_call.1} parent=5 // pred_fallthru
        _
      %p148 = scmp.lt.s32.totalorder %s13, 2
      // Predicated region
      $region21: #{tpu_custom_call.1} parent=5 // pred_check
        %p149 = pneg %p148
      $region22: #{tpu_custom_call.1} parent=5 // pred_check_branch
        %151 = sbr.rel (%p149) target = $region24
      $region23: #{tpu_custom_call.1} parent=5 // pred_region
        // Predicated region
        $region25: #{tpu_custom_call.1} parent=23 // pred_check
          %p152 = pneg %p33
        $region26: #{tpu_custom_call.1} parent=23 // pred_check_branch
          %154 = sbr.rel (%p152) target = $region28
        $region27: #{tpu_custom_call.1} parent=23 // pred_region
          %s155 = sand.u32 %s23, 1
          %s156 = scalar_lea.sflag [#allocation3], %s155
          %s157 = sand.u32 %s23, 1
          %s158 = smul.addr %s157, 64
          %s159 = scalar_lea.vmem [#allocation2], %s158
          %s160 = smul.u32 4, %s13
          %s162 = ssub.s32 1024, 1024
          %163 = vsyncadd %s156, %s162
          %s164 = smul.addr %s160, 2
          %s165 = smul.addr %s164, 128
          %s166 = scalar_lea.hbm %s0, %s165
          %s167 = sshll.u32 %s159, 4
          %s168 = int_to_ptr.vmem [resolvable:$true] %s167
          %173 = dma.hbm_to_vmem [thread:$0]  %s166, 1024, %s168, %s156, 128, 128, 8
        $region28: #{tpu_custom_call.1} parent=23 // pred_fallthru
          _
      $region24: #{tpu_custom_call.1} parent=5 // pred_fallthru
        _
      %p174 = scmp.le.s32.totalorder 1, %s13
      %p175 = scmp.lt.s32.totalorder %s13, 3
      %p176 = pnand %p174, %p175
      %p177 = pneg %p176
      // Predicated region
      $region29: #{tpu_custom_call.1} parent=5 // pred_check
        _
      $region30: #{tpu_custom_call.1} parent=5 // pred_check_branch
        %179 = sbr.rel (%p176) target = $region32
      $region31: #{tpu_custom_call.1} parent=5 // pred_region
        %s180 = ssub.s32 %s13, 1
        %s181 = sand.u32 %s26, 1
        %s182 = scalar_lea.sflag [#allocation3], %s181
        %s183 = sand.u32 %s26, 1
        %s184 = smul.addr %s183, 64
        %s185 = scalar_lea.vmem [#allocation2], %s184
        // Predicated region
        $region33: #{tpu_custom_call.1} parent=31 // pred_check
          %p186 = pneg %p39
        $region34: #{tpu_custom_call.1} parent=31 // pred_check_branch
          %188 = sbr.rel (%p186) target = $region36
        $region35: #{tpu_custom_call.1} parent=31 // pred_region
          %189 = dma.done %s182, 1024
        $region36: #{tpu_custom_call.1} parent=31 // pred_fallthru
          _
        // Predicated region
        $region37: #{tpu_custom_call.1} parent=31 // pred_check
          %p190 = pneg %p60
        $region38: #{tpu_custom_call.1} parent=31 // pred_check_branch
          %192 = sbr.rel (%p190) target = $region40
        $region39: #{tpu_custom_call.1} parent=31 // pred_region
          %193 = dma.done [#allocation5], 256
        $region40: #{tpu_custom_call.1} parent=31 // pred_fallthru
          _
        // Predicated region
        $region41: #{tpu_custom_call.1} parent=31 // pred_check
          %p194 = pneg %p81
        $region42: #{tpu_custom_call.1} parent=31 // pred_check_branch
          %196 = sbr.rel (%p194) target = $region44
        $region43: #{tpu_custom_call.1} parent=31 // pred_region
          %197 = dma.done [#allocation5], 256
        $region44: #{tpu_custom_call.1} parent=31 // pred_fallthru
          _
        %s198 = sand.u32 %s26, 1
        %s199 = scalar_lea.sflag [#allocation3], %s198
        %s200 = sand.u32 %s26, 1
        %s201 = smul.addr %s200, 64
        %s202 = scalar_lea.vmem [#allocation2], %s201
        %p203 = pneg %p39
        %p204 = pneg %p36
        %p205 = pneg %p60
        %p206 = pneg %p57
        %p207 = pneg %p81
        %p208 = pneg %p78
        %p209 = pneg %p107
        %p210 = pneg %p104
        %s211 = smul.u32 17, %s18
        %p212 = scmp.lt.s32.totalorder %s211, 33
        %s213 = scalar_select %p212, %s211, 33
        %s214 = smul.addr %s213, 8
        %s215 = scalar_lea.vmem %s3, %s214
        %s216 = smul.u32 4, %s18
        %s217 = smul.u32 17, %s18
        %p218 = scmp.lt.s32.totalorder %s217, 33
        %s219 = scalar_select %p218, %s217, 33
        %s220 = smul.addr %s219, 8
        %s221 = scalar_lea.vmem %s3, %s220
        %s222 = smul.u32 17, %s18
        %v223 = vld [vmem:[%s185] sm:$0xff]
        %v224 = vld [vmem:[%s185 + $0x8] sm:$0xff]
        %v225 = vld [vmem:[%s185 + $0x10] sm:$0xff]
        %v226 = vld [vmem:[%s185 + $0x18] sm:$0xff]
        %v227 = vld [vmem:[%s185 + $0x20] sm:$0xff]
        %v228 = vld [vmem:[%s185 + $0x28] sm:$0xff]
        %v229 = vld [vmem:[%s185 + $0x30] sm:$0xff]
        %v230 = vld [vmem:[%s185 + $0x38] sm:$0xff]
        %231 = vxpose.xlu0.b32.start [1/16] %v223, 128
        %232 = vxpose.xlu0.b32.cont [2/16] %v224, 128
        %233 = vxpose.xlu0.b32.cont [3/16] 0.0, 128
        %234 = vxpose.xlu0.b32.cont [4/16] 0.0, 128
        %235 = vxpose.xlu0.b32.cont [5/16] 0.0, 128
        %236 = vxpose.xlu0.b32.cont [6/16] 0.0, 128
        %237 = vxpose.xlu0.b32.cont [7/16] 0.0, 128
        %238 = vxpose.xlu0.b32.cont [8/16] 0.0, 128
        %239 = vxpose.xlu0.b32.cont [9/16] 0.0, 128
        %240 = vxpose.xlu0.b32.cont [10/16] 0.0, 128
        %241 = vxpose.xlu0.b32.cont [11/16] 0.0, 128
        %242 = vxpose.xlu0.b32.cont [12/16] 0.0, 128
        %243 = vxpose.xlu0.b32.cont [13/16] 0.0, 128
        %244 = vxpose.xlu0.b32.cont [14/16] 0.0, 128
        %245 = vxpose.xlu0.b32.cont [15/16] 0.0, 128
        %246 = vxpose.xlu0.b32.end [16/16] 0.0, 128
        %v247 = vpop.trf.xlu0
        %v248 = vpop.trf.xlu0
        %v249 = vpop.trf.xlu0
        %v250 = vpop.trf.xlu0
        %v251 = vpop.trf.xlu0
        %v252 = vpop.trf.xlu0
        %v253 = vpop.trf.xlu0
        %v254 = vpop.trf.xlu0
        %v255 = vpop.trf.xlu0
        %v256 = vpop.trf.xlu0
        %v257 = vpop.trf.xlu0
        %v258 = vpop.trf.xlu0
        %v259 = vpop.trf.xlu0
        %v260 = vpop.trf.xlu0
        %v261 = vpop.trf.xlu0
        %v262 = vpop.trf.xlu0
        %263 = vxpose.xlu0.b32.start [1/16] %v225, 128
        %264 = vxpose.xlu0.b32.cont [2/16] %v226, 128
        %265 = vxpose.xlu0.b32.cont [3/16] 0.0, 128
        %266 = vxpose.xlu0.b32.cont [4/16] 0.0, 128
        %267 = vxpose.xlu0.b32.cont [5/16] 0.0, 128
        %268 = vxpose.xlu0.b32.cont [6/16] 0.0, 128
        %269 = vxpose.xlu0.b32.cont [7/16] 0.0, 128
        %270 = vxpose.xlu0.b32.cont [8/16] 0.0, 128
        %271 = vxpose.xlu0.b32.cont [9/16] 0.0, 128
        %272 = vxpose.xlu0.b32.cont [10/16] 0.0, 128
        %273 = vxpose.xlu0.b32.cont [11/16] 0.0, 128
        %274 = vxpose.xlu0.b32.cont [12/16] 0.0, 128
        %275 = vxpose.xlu0.b32.cont [13/16] 0.0, 128
        %276 = vxpose.xlu0.b32.cont [14/16] 0.0, 128
        %277 = vxpose.xlu0.b32.cont [15/16] 0.0, 128
        %278 = vxpose.xlu0.b32.end [16/16] 0.0, 128
        %v279 = vpop.trf.xlu0
        %v280 = vpop.trf.xlu0
        %v281 = vpop.trf.xlu0
        %v282 = vpop.trf.xlu0
        %v283 = vpop.trf.xlu0
        %v284 = vpop.trf.xlu0
        %v285 = vpop.trf.xlu0
        %v286 = vpop.trf.xlu0
        %v287 = vpop.trf.xlu0
        %v288 = vpop.trf.xlu0
        %v289 = vpop.trf.xlu0
        %v290 = vpop.trf.xlu0
        %v291 = vpop.trf.xlu0
        %v292 = vpop.trf.xlu0
        %v293 = vpop.trf.xlu0
        %v294 = vpop.trf.xlu0
        %295 = vxpose.xlu0.b32.start [1/16] %v227, 128
        %296 = vxpose.xlu0.b32.cont [2/16] %v228, 128
        %297 = vxpose.xlu0.b32.cont [3/16] 0.0, 128
        %298 = vxpose.xlu0.b32.cont [4/16] 0.0, 128
        %299 = vxpose.xlu0.b32.cont [5/16] 0.0, 128
        %300 = vxpose.xlu0.b32.cont [6/16] 0.0, 128
        %301 = vxpose.xlu0.b32.cont [7/16] 0.0, 128
        %302 = vxpose.xlu0.b32.cont [8/16] 0.0, 128
        %303 = vxpose.xlu0.b32.cont [9/16] 0.0, 128
        %304 = vxpose.xlu0.b32.cont [10/16] 0.0, 128
        %305 = vxpose.xlu0.b32.cont [11/16] 0.0, 128
        %306 = vxpose.xlu0.b32.cont [12/16] 0.0, 128
        %307 = vxpose.xlu0.b32.cont [13/16] 0.0, 128
        %308 = vxpose.xlu0.b32.cont [14/16] 0.0, 128
        %309 = vxpose.xlu0.b32.cont [15/16] 0.0, 128
        %310 = vxpose.xlu0.b32.end [16/16] 0.0, 128
        %v311 = vpop.trf.xlu0
        %v312 = vpop.trf.xlu0
        %v313 = vpop.trf.xlu0
        %v314 = vpop.trf.xlu0
        %v315 = vpop.trf.xlu0
        %v316 = vpop.trf.xlu0
        %v317 = vpop.trf.xlu0
        %v318 = vpop.trf.xlu0
        %v319 = vpop.trf.xlu0
        %v320 = vpop.trf.xlu0
        %v321 = vpop.trf.xlu0
        %v322 = vpop.trf.xlu0
        %v323 = vpop.trf.xlu0
        %v324 = vpop.trf.xlu0
        %v325 = vpop.trf.xlu0
        %v326 = vpop.trf.xlu0
        %327 = vxpose.xlu0.b32.start [1/16] %v229, 128
        %328 = vxpose.xlu0.b32.cont [2/16] %v230, 128
        %329 = vxpose.xlu0.b32.cont [3/16] 0.0, 128
        %330 = vxpose.xlu0.b32.cont [4/16] 0.0, 128
        %331 = vxpose.xlu0.b32.cont [5/16] 0.0, 128
        %332 = vxpose.xlu0.b32.cont [6/16] 0.0, 128
        %333 = vxpose.xlu0.b32.cont [7/16] 0.0, 128
        %334 = vxpose.xlu0.b32.cont [8/16] 0.0, 128
        %335 = vxpose.xlu0.b32.cont [9/16] 0.0, 128
        %336 = vxpose.xlu0.b32.cont [10/16] 0.0, 128
        %337 = vxpose.xlu0.b32.cont [11/16] 0.0, 128
        %338 = vxpose.xlu0.b32.cont [12/16] 0.0, 128
        %339 = vxpose.xlu0.b32.cont [13/16] 0.0, 128
        %340 = vxpose.xlu0.b32.cont [14/16] 0.0, 128
        %341 = vxpose.xlu0.b32.cont [15/16] 0.0, 128
        %342 = vxpose.xlu0.b32.end [16/16] 0.0, 128
        %v343 = vpop.trf.xlu0
        %v344 = vpop.trf.xlu0
        %v345 = vpop.trf.xlu0
        %v346 = vpop.trf.xlu0
        %v347 = vpop.trf.xlu0
        %v348 = vpop.trf.xlu0
        %v349 = vpop.trf.xlu0
        %v350 = vpop.trf.xlu0
        %v351 = vpop.trf.xlu0
        %v352 = vpop.trf.xlu0
        %v353 = vpop.trf.xlu0
        %v354 = vpop.trf.xlu0
        %v355 = vpop.trf.xlu0
        %v356 = vpop.trf.xlu0
        %v357 = vpop.trf.xlu0
        %v358 = vpop.trf.xlu0
        %v359 = vld [vmem:[#allocation4] sm:$0xff]
        %v360 = vld [vmem:[#allocation4 + $0x8] sm:$0xff]
        %vm361 = vcmask 130048
        %v363 = vsel %vm361, %v247, 0
        %v366 = vsel %vm361, %v248, 0
        %v369 = vsel %vm361, %v279, 0
        %v372 = vsel %vm361, %v280, 0
        %v375 = vsel %vm361, %v311, 0
        %v378 = vsel %vm361, %v312, 0
        %v381 = vsel %vm361, %v343, 0
        %v384 = vsel %vm361, %v344, 0
        %386 = vmatprep.subr.mxu0 0.0
        %387 = vmatpush1.msra.mxu0 %v359
        %388 = vmatprep.subr.mxu0 0.0
        %389 = vmatpush1.msra.mxu0 %v360
        %390 = vmatprep.subr.mxu0 0.0
        %391 = vmatpush1.msra.mxu0 0.0
        %392 = vmatprep.subr.mxu0 0.0
        %393 = vmatpush1.msra.mxu0 0.0
        %394 = vmatprep.subr.mxu0 0.0
        %395 = vmatpush1.msra.mxu0 0.0
        %396 = vmatprep.subr.mxu0 0.0
        %397 = vmatpush1.msra.mxu0 0.0
        %398 = vmatprep.subr.mxu0 0.0
        %399 = vmatpush1.msra.mxu0 0.0
        %400 = vmatprep.subr.mxu0 0.0
        %401 = vmatpush1.msra.mxu0 0.0
        %402 = vmatprep.subr.mxu0 0.0
        %403 = vmatpush1.msra.mxu0 0.0
        %404 = vmatprep.subr.mxu0 0.0
        %405 = vmatpush1.msra.mxu0 0.0
        %406 = vmatprep.subr.mxu0 0.0
        %407 = vmatpush1.msra.mxu0 0.0
        %408 = vmatprep.subr.mxu0 0.0
        %409 = vmatpush1.msra.mxu0 0.0
        %410 = vmatprep.subr.mxu0 0.0
        %411 = vmatpush1.msra.mxu0 0.0
        %412 = vmatprep.subr.mxu0 0.0
        %413 = vmatpush1.msra.mxu0 0.0
        %414 = vmatprep.subr.mxu0 0.0
        %415 = vmatpush1.msra.mxu0 0.0
        %416 = vmatprep.subr.mxu0 0.0
        %417 = vmatpush1.msra.mxu0 0.0
        %418 = vmatprep.subr.mxu0 0.0
        %419 = vmatpush1.msra.mxu0 0.0
        %420 = vmatprep.subr.mxu0 0.0
        %421 = vmatpush1.msra.mxu0 0.0
        %422 = vmatprep.subr.mxu0 0.0
        %423 = vmatpush1.msra.mxu0 0.0
        %424 = vmatprep.subr.mxu0 0.0
        %425 = vmatpush1.msra.mxu0 0.0
        %426 = vmatprep.subr.mxu0 0.0
        %427 = vmatpush1.msra.mxu0 0.0
        %428 = vmatprep.subr.mxu0 0.0
        %429 = vmatpush1.msra.mxu0 0.0
        %430 = vmatprep.subr.mxu0 0.0
        %431 = vmatpush1.msra.mxu0 0.0
        %432 = vmatprep.subr.mxu0 0.0
        %433 = vmatpush1.msra.mxu0 0.0
        %434 = vmatprep.subr.mxu0 0.0
        %435 = vmatpush1.msra.mxu0 0.0
        %436 = vmatprep.subr.mxu0 0.0
        %437 = vmatpush1.msra.mxu0 0.0
        %438 = vmatprep.subr.mxu0 0.0
        %439 = vmatpush1.msra.mxu0 0.0
        %440 = vmatprep.subr.mxu0 0.0
        %441 = vmatpush1.msra.mxu0 0.0
        %442 = vmatprep.subr.mxu0 0.0
        %443 = vmatpush1.msra.mxu0 0.0
        %444 = vmatprep.subr.mxu0 0.0
        %445 = vmatpush1.msra.mxu0 0.0
        %446 = vmatprep.subr.mxu0 0.0
        %447 = vmatpush1.msra.mxu0 0.0
        %448 = vmatprep.subr.mxu0 0.0
        %449 = vmatpush1.msra.mxu0 0.0
        %450 = vmatprep.mubr.f32.mxu0 0.0
        %451 = vmatmul.mubr.f32.gmra.mrb[0].mxu0 %v363
        %v452 = vpop.f32.mrb[0].mxu0
        %v453 = vadd.f32 0.0, %v452
        %v454 = vpop.f32.mrb[0].mxu0
        %455 = vmatprep.mubr.f32.mxu0 0.0
        %456 = vmatmul.mubr.f32.gmra.mrb[0].mxu0 %v366
        %v457 = vpop.f32.mrb[0].mxu0
        %v458 = vadd.f32 0.0, %v457
        %v459 = vpop.f32.mrb[0].mxu0
        %460 = vmatprep.mubr.f32.mxu0 0.0
        %461 = vmatmul.mubr.f32.gmra.mrb[0].mxu0 %v369
        %v462 = vpop.f32.mrb[0].mxu0
        %v463 = vadd.f32 0.0, %v462
        %v464 = vpop.f32.mrb[0].mxu0
        %465 = vmatprep.mubr.f32.mxu0 0.0
        %466 = vmatmul.mubr.f32.gmra.mrb[0].mxu0 %v372
        %v467 = vpop.f32.mrb[0].mxu0
        %v468 = vadd.f32 0.0, %v467
        %v469 = vpop.f32.mrb[0].mxu0
        %470 = vmatprep.mubr.f32.mxu0 0.0
        %471 = vmatmul.mubr.f32.gmra.mrb[0].mxu0 %v375
        %v472 = vpop.f32.mrb[0].mxu0
        %v473 = vadd.f32 0.0, %v472
        %v474 = vpop.f32.mrb[0].mxu0
        %475 = vmatprep.mubr.f32.mxu0 0.0
        %476 = vmatmul.mubr.f32.gmra.mrb[0].mxu0 %v378
        %v477 = vpop.f32.mrb[0].mxu0
        %v478 = vadd.f32 0.0, %v477
        %v479 = vpop.f32.mrb[0].mxu0
        %480 = vmatprep.mubr.f32.mxu0 0.0
        %481 = vmatmul.mubr.f32.gmra.mrb[0].mxu0 %v381
        %v482 = vpop.f32.mrb[0].mxu0
        %v483 = vadd.f32 0.0, %v482
        %v484 = vpop.f32.mrb[0].mxu0
        %485 = vmatprep.mubr.f32.mxu0 0.0
        %486 = vmatmul.mubr.f32.gmra.mrb[0].mxu0 %v384
        %v487 = vpop.f32.mrb[0].mxu0
        %v488 = vadd.f32 0.0, %v487
        %v489 = vpop.f32.mrb[0].mxu0
        %490 = vdwg.mxu0
        %491 = vxpose.xlu0.b32.start [1/16] %v453, 128
        %492 = vxpose.xlu0.b32.cont [2/16] %v458, 128
        %493 = vxpose.xlu0.b32.cont [3/16] 0.0, 128
        %494 = vxpose.xlu0.b32.cont [4/16] 0.0, 128
        %495 = vxpose.xlu0.b32.cont [5/16] 0.0, 128
        %496 = vxpose.xlu0.b32.cont [6/16] 0.0, 128
        %497 = vxpose.xlu0.b32.cont [7/16] 0.0, 128
        %498 = vxpose.xlu0.b32.cont [8/16] 0.0, 128
        %499 = vxpose.xlu0.b32.cont [9/16] 0.0, 128
        %500 = vxpose.xlu0.b32.cont [10/16] 0.0, 128
        %501 = vxpose.xlu0.b32.cont [11/16] 0.0, 128
        %502 = vxpose.xlu0.b32.cont [12/16] 0.0, 128
        %503 = vxpose.xlu0.b32.cont [13/16] 0.0, 128
        %504 = vxpose.xlu0.b32.cont [14/16] 0.0, 128
        %505 = vxpose.xlu0.b32.cont [15/16] 0.0, 128
        %506 = vxpose.xlu0.b32.end [16/16] 0.0, 128
        %v507 = vpop.trf.xlu0
        %v508 = vpop.trf.xlu0
        %v509 = vpop.trf.xlu0
        %v510 = vpop.trf.xlu0
        %v511 = vpop.trf.xlu0
        %v512 = vpop.trf.xlu0
        %v513 = vpop.trf.xlu0
        %v514 = vpop.trf.xlu0
        %v515 = vpop.trf.xlu0
        %v516 = vpop.trf.xlu0
        %v517 = vpop.trf.xlu0
        %v518 = vpop.trf.xlu0
        %v519 = vpop.trf.xlu0
        %v520 = vpop.trf.xlu0
        %v521 = vpop.trf.xlu0
        %v522 = vpop.trf.xlu0
        %523 = vxpose.xlu0.b32.start [1/16] %v463, 128
        %524 = vxpose.xlu0.b32.cont [2/16] %v468, 128
        %525 = vxpose.xlu0.b32.cont [3/16] 0.0, 128
        %526 = vxpose.xlu0.b32.cont [4/16] 0.0, 128
        %527 = vxpose.xlu0.b32.cont [5/16] 0.0, 128
        %528 = vxpose.xlu0.b32.cont [6/16] 0.0, 128
        %529 = vxpose.xlu0.b32.cont [7/16] 0.0, 128
        %530 = vxpose.xlu0.b32.cont [8/16] 0.0, 128
        %531 = vxpose.xlu0.b32.cont [9/16] 0.0, 128
        %532 = vxpose.xlu0.b32.cont [10/16] 0.0, 128
        %533 = vxpose.xlu0.b32.cont [11/16] 0.0, 128
        %534 = vxpose.xlu0.b32.cont [12/16] 0.0, 128
        %535 = vxpose.xlu0.b32.cont [13/16] 0.0, 128
        %536 = vxpose.xlu0.b32.cont [14/16] 0.0, 128
        %537 = vxpose.xlu0.b32.cont [15/16] 0.0, 128
        %538 = vxpose.xlu0.b32.end [16/16] 0.0, 128
        %v539 = vpop.trf.xlu0
        %v540 = vpop.trf.xlu0
        %v541 = vpop.trf.xlu0
        %v542 = vpop.trf.xlu0
        %v543 = vpop.trf.xlu0
        %v544 = vpop.trf.xlu0
        %v545 = vpop.trf.xlu0
        %v546 = vpop.trf.xlu0
        %v547 = vpop.trf.xlu0
        %v548 = vpop.trf.xlu0
        %v549 = vpop.trf.xlu0
        %v550 = vpop.trf.xlu0
        %v551 = vpop.trf.xlu0
        %v552 = vpop.trf.xlu0
        %v553 = vpop.trf.xlu0
        %v554 = vpop.trf.xlu0
        %555 = vxpose.xlu0.b32.start [1/16] %v473, 128
        %556 = vxpose.xlu0.b32.cont [2/16] %v478, 128
        %557 = vxpose.xlu0.b32.cont [3/16] 0.0, 128
        %558 = vxpose.xlu0.b32.cont [4/16] 0.0, 128
        %559 = vxpose.xlu0.b32.cont [5/16] 0.0, 128
        %560 = vxpose.xlu0.b32.cont [6/16] 0.0, 128
        %561 = vxpose.xlu0.b32.cont [7/16] 0.0, 128
        %562 = vxpose.xlu0.b32.cont [8/16] 0.0, 128
        %563 = vxpose.xlu0.b32.cont [9/16] 0.0, 128
        %564 = vxpose.xlu0.b32.cont [10/16] 0.0, 128
        %565 = vxpose.xlu0.b32.cont [11/16] 0.0, 128
        %566 = vxpose.xlu0.b32.cont [12/16] 0.0, 128
        %567 = vxpose.xlu0.b32.cont [13/16] 0.0, 128
        %568 = vxpose.xlu0.b32.cont [14/16] 0.0, 128
        %569 = vxpose.xlu0.b32.cont [15/16] 0.0, 128
        %570 = vxpose.xlu0.b32.end [16/16] 0.0, 128
        %v571 = vpop.trf.xlu0
        %v572 = vpop.trf.xlu0
        %v573 = vpop.trf.xlu0
        %v574 = vpop.trf.xlu0
        %v575 = vpop.trf.xlu0
        %v576 = vpop.trf.xlu0
        %v577 = vpop.trf.xlu0
        %v578 = vpop.trf.xlu0
        %v579 = vpop.trf.xlu0
        %v580 = vpop.trf.xlu0
        %v581 = vpop.trf.xlu0
        %v582 = vpop.trf.xlu0
        %v583 = vpop.trf.xlu0
        %v584 = vpop.trf.xlu0
        %v585 = vpop.trf.xlu0
        %v586 = vpop.trf.xlu0
        %587 = vxpose.xlu0.b32.start [1/16] %v483, 128
        %588 = vxpose.xlu0.b32.cont [2/16] %v488, 128
        %589 = vxpose.xlu0.b32.cont [3/16] 0.0, 128
        %590 = vxpose.xlu0.b32.cont [4/16] 0.0, 128
        %591 = vxpose.xlu0.b32.cont [5/16] 0.0, 128
        %592 = vxpose.xlu0.b32.cont [6/16] 0.0, 128
        %593 = vxpose.xlu0.b32.cont [7/16] 0.0, 128
        %594 = vxpose.xlu0.b32.cont [8/16] 0.0, 128
        %595 = vxpose.xlu0.b32.cont [9/16] 0.0, 128
        %596 = vxpose.xlu0.b32.cont [10/16] 0.0, 128
        %597 = vxpose.xlu0.b32.cont [11/16] 0.0, 128
        %598 = vxpose.xlu0.b32.cont [12/16] 0.0, 128
        %599 = vxpose.xlu0.b32.cont [13/16] 0.0, 128
        %600 = vxpose.xlu0.b32.cont [14/16] 0.0, 128
        %601 = vxpose.xlu0.b32.cont [15/16] 0.0, 128
        %602 = vxpose.xlu0.b32.end [16/16] 0.0, 128
        %v603 = vpop.trf.xlu0
        %v604 = vpop.trf.xlu0
        %v605 = vpop.trf.xlu0
        %v606 = vpop.trf.xlu0
        %v607 = vpop.trf.xlu0
        %v608 = vpop.trf.xlu0
        %v609 = vpop.trf.xlu0
        %v610 = vpop.trf.xlu0
        %v611 = vpop.trf.xlu0
        %v612 = vpop.trf.xlu0
        %v613 = vpop.trf.xlu0
        %v614 = vpop.trf.xlu0
        %v615 = vpop.trf.xlu0
        %v616 = vpop.trf.xlu0
        %v617 = vpop.trf.xlu0
        %v618 = vpop.trf.xlu0
        %v639 = vcombine.high %v507, %v507
        %v641 = vunpack.c.l.s4 1983009808
        %v642 = vunpack.c.0.s8 %v641
        %v643 = vlaneseq
        %v644 = vshrl.u32 %v643, 7
        %v645 = vsub.s32 %v642, %v644
        %v646 = vrot.slane %v507, %v645
        %v648 = vunpack.c.l.s4 1983009808
        %v649 = vunpack.c.0.s8 %v648
        %v650 = vlaneseq
        %v651 = vshrl.u32 %v650, 7
        %v652 = vsub.s32 %v649, %v651
        %v653 = vrot.slane %v639, %v652
        %v654 = vcombine.high %v646, %v646
        %v655 = vcombine.high %v653, %v653
        %v656 = vcombine.high %v508, %v508
        %v658 = vunpack.c.l.s4 1983009808
        %v659 = vunpack.c.0.s8 %v658
        %v660 = vlaneseq
        %v661 = vshrl.u32 %v660, 7
        %v662 = vsub.s32 %v659, %v661
        %v663 = vrot.slane %v508, %v662
        %v665 = vunpack.c.l.s4 1983009808
        %v666 = vunpack.c.0.s8 %v665
        %v667 = vlaneseq
        %v668 = vshrl.u32 %v667, 7
        %v669 = vsub.s32 %v666, %v668
        %v670 = vrot.slane %v656, %v669
        %v671 = vcombine.high %v663, %v663
        %v672 = vcombine.high %v670, %v670
        %v673 = vcombine.high %v509, %v509
        %v675 = vunpack.c.l.s4 1983009808
        %v676 = vunpack.c.0.s8 %v675
        %v677 = vlaneseq
        %v678 = vshrl.u32 %v677, 7
        %v679 = vsub.s32 %v676, %v678
        %v680 = vrot.slane %v509, %v679
        %v682 = vunpack.c.l.s4 1983009808
        %v683 = vunpack.c.0.s8 %v682
        %v684 = vlaneseq
        %v685 = vshrl.u32 %v684, 7
        %v686 = vsub.s32 %v683, %v685
        %v687 = vrot.slane %v673, %v686
        %v688 = vcombine.high %v680, %v680
        %v689 = vcombine.high %v687, %v687
        %v690 = vcombine.high %v510, %v510
        %v692 = vunpack.c.l.s4 1983009808
        %v693 = vunpack.c.0.s8 %v692
        %v694 = vlaneseq
        %v695 = vshrl.u32 %v694, 7
        %v696 = vsub.s32 %v693, %v695
        %v697 = vrot.slane %v510, %v696
        %v699 = vunpack.c.l.s4 1983009808
        %v700 = vunpack.c.0.s8 %v699
        %v701 = vlaneseq
        %v702 = vshrl.u32 %v701, 7
        %v703 = vsub.s32 %v700, %v702
        %v704 = vrot.slane %v690, %v703
        %v705 = vcombine.high %v697, %v697
        %v706 = vcombine.high %v704, %v704
        %v708 = vunpack.c.l.s4 1983009808
        %v709 = vunpack.c.0.s8 %v708
        %v710 = vlaneseq
        %v711 = vshrl.u32 %v710, 7
        %v712 = vsub.s32 %v709, %v711
        %v713 = vrot.slane %v511, %v712
        %v714 = vcombine.high %v539, %v539
        %v716 = vunpack.c.l.s4 1983009808
        %v717 = vunpack.c.0.s8 %v716
        %v718 = vlaneseq
        %v719 = vshrl.u32 %v718, 7
        %v720 = vsub.s32 %v717, %v719
        %v721 = vrot.slane %v539, %v720
        %v723 = vunpack.c.l.s4 1983009808
        %v724 = vunpack.c.0.s8 %v723
        %v725 = vlaneseq
        %v726 = vshrl.u32 %v725, 7
        %v727 = vsub.s32 %v724, %v726
        %v728 = vrot.slane %v714, %v727
        %v729 = vcombine.high %v721, %v721
        %v730 = vcombine.high %v728, %v728
        %v731 = vcombine.high %v540, %v540
        %v733 = vunpack.c.l.s4 1983009808
        %v734 = vunpack.c.0.s8 %v733
        %v735 = vlaneseq
        %v736 = vshrl.u32 %v735, 7
        %v737 = vsub.s32 %v734, %v736
        %v738 = vrot.slane %v540, %v737
        %v740 = vunpack.c.l.s4 1983009808
        %v741 = vunpack.c.0.s8 %v740
        %v742 = vlaneseq
        %v743 = vshrl.u32 %v742, 7
        %v744 = vsub.s32 %v741, %v743
        %v745 = vrot.slane %v731, %v744
        %v746 = vcombine.high %v738, %v738
        %v747 = vcombine.high %v745, %v745
        %v748 = vcombine.high %v541, %v541
        %v750 = vunpack.c.l.s4 1983009808
        %v751 = vunpack.c.0.s8 %v750
        %v752 = vlaneseq
        %v753 = vshrl.u32 %v752, 7
        %v754 = vsub.s32 %v751, %v753
        %v755 = vrot.slane %v541, %v754
        %v757 = vunpack.c.l.s4 1983009808
        %v758 = vunpack.c.0.s8 %v757
        %v759 = vlaneseq
        %v760 = vshrl.u32 %v759, 7
        %v761 = vsub.s32 %v758, %v760
        %v762 = vrot.slane %v748, %v761
        %v763 = vcombine.high %v755, %v755
        %v764 = vcombine.high %v762, %v762
        %v765 = vcombine.high %v542, %v542
        %v767 = vunpack.c.l.s4 1983009808
        %v768 = vunpack.c.0.s8 %v767
        %v769 = vlaneseq
        %v770 = vshrl.u32 %v769, 7
        %v771 = vsub.s32 %v768, %v770
        %v772 = vrot.slane %v542, %v771
        %v774 = vunpack.c.l.s4 1983009808
        %v775 = vunpack.c.0.s8 %v774
        %v776 = vlaneseq
        %v777 = vshrl.u32 %v776, 7
        %v778 = vsub.s32 %v775, %v777
        %v779 = vrot.slane %v765, %v778
        %v780 = vcombine.high %v772, %v772
        %v781 = vcombine.high %v779, %v779
        %v783 = vunpack.c.l.s4 1983009808
        %v784 = vunpack.c.0.s8 %v783
        %v785 = vlaneseq
        %v786 = vshrl.u32 %v785, 7
        %v787 = vsub.s32 %v784, %v786
        %v788 = vrot.slane %v543, %v787
        %v789 = vcombine.high %v571, %v571
        %v791 = vunpack.c.l.s4 1983009808
        %v792 = vunpack.c.0.s8 %v791
        %v793 = vlaneseq
        %v794 = vshrl.u32 %v793, 7
        %v795 = vsub.s32 %v792, %v794
        %v796 = vrot.slane %v571, %v795
        %v798 = vunpack.c.l.s4 1983009808
        %v799 = vunpack.c.0.s8 %v798
        %v800 = vlaneseq
        %v801 = vshrl.u32 %v800, 7
        %v802 = vsub.s32 %v799, %v801
        %v803 = vrot.slane %v789, %v802
        %v804 = vcombine.high %v796, %v796
        %v805 = vcombine.high %v803, %v803
        %v806 = vcombine.high %v572, %v572
        %v808 = vunpack.c.l.s4 1983009808
        %v809 = vunpack.c.0.s8 %v808
        %v810 = vlaneseq
        %v811 = vshrl.u32 %v810, 7
        %v812 = vsub.s32 %v809, %v811
        %v813 = vrot.slane %v572, %v812
        %v815 = vunpack.c.l.s4 1983009808
        %v816 = vunpack.c.0.s8 %v815
        %v817 = vlaneseq
        %v818 = vshrl.u32 %v817, 7
        %v819 = vsub.s32 %v816, %v818
        %v820 = vrot.slane %v806, %v819
        %v821 = vcombine.high %v813, %v813
        %v822 = vcombine.high %v820, %v820
        %v823 = vcombine.high %v573, %v573
        %v825 = vunpack.c.l.s4 1983009808
        %v826 = vunpack.c.0.s8 %v825
        %v827 = vlaneseq
        %v828 = vshrl.u32 %v827, 7
        %v829 = vsub.s32 %v826, %v828
        %v830 = vrot.slane %v573, %v829
        %v832 = vunpack.c.l.s4 1983009808
        %v833 = vunpack.c.0.s8 %v832
        %v834 = vlaneseq
        %v835 = vshrl.u32 %v834, 7
        %v836 = vsub.s32 %v833, %v835
        %v837 = vrot.slane %v823, %v836
        %v838 = vcombine.high %v830, %v830
        %v839 = vcombine.high %v837, %v837
        %v840 = vcombine.high %v574, %v574
        %v842 = vunpack.c.l.s4 1983009808
        %v843 = vunpack.c.0.s8 %v842
        %v844 = vlaneseq
        %v845 = vshrl.u32 %v844, 7
        %v846 = vsub.s32 %v843, %v845
        %v847 = vrot.slane %v574, %v846
        %v849 = vunpack.c.l.s4 1983009808
        %v850 = vunpack.c.0.s8 %v849
        %v851 = vlaneseq
        %v852 = vshrl.u32 %v851, 7
        %v853 = vsub.s32 %v850, %v852
        %v854 = vrot.slane %v840, %v853
        %v855 = vcombine.high %v847, %v847
        %v856 = vcombine.high %v854, %v854
        %v858 = vunpack.c.l.s4 1983009808
        %v859 = vunpack.c.0.s8 %v858
        %v860 = vlaneseq
        %v861 = vshrl.u32 %v860, 7
        %v862 = vsub.s32 %v859, %v861
        %v863 = vrot.slane %v575, %v862
        %v864 = vcombine.high %v603, %v603
        %v866 = vunpack.c.l.s4 1983009808
        %v867 = vunpack.c.0.s8 %v866
        %v868 = vlaneseq
        %v869 = vshrl.u32 %v868, 7
        %v870 = vsub.s32 %v867, %v869
        %v871 = vrot.slane %v603, %v870
        %v873 = vunpack.c.l.s4 1983009808
        %v874 = vunpack.c.0.s8 %v873
        %v875 = vlaneseq
        %v876 = vshrl.u32 %v875, 7
        %v877 = vsub.s32 %v874, %v876
        %v878 = vrot.slane %v864, %v877
        %v879 = vcombine.high %v871, %v871
        %v880 = vcombine.high %v878, %v878
        %v881 = vcombine.high %v604, %v604
        %v883 = vunpack.c.l.s4 1983009808
        %v884 = vunpack.c.0.s8 %v883
        %v885 = vlaneseq
        %v886 = vshrl.u32 %v885, 7
        %v887 = vsub.s32 %v884, %v886
        %v888 = vrot.slane %v604, %v887
        %v890 = vunpack.c.l.s4 1983009808
        %v891 = vunpack.c.0.s8 %v890
        %v892 = vlaneseq
        %v893 = vshrl.u32 %v892, 7
        %v894 = vsub.s32 %v891, %v893
        %v895 = vrot.slane %v881, %v894
        %v896 = vcombine.high %v888, %v888
        %v897 = vcombine.high %v895, %v895
        %v898 = vcombine.high %v605, %v605
        %v900 = vunpack.c.l.s4 1983009808
        %v901 = vunpack.c.0.s8 %v900
        %v902 = vlaneseq
        %v903 = vshrl.u32 %v902, 7
        %v904 = vsub.s32 %v901, %v903
        %v905 = vrot.slane %v605, %v904
        %v907 = vunpack.c.l.s4 1983009808
        %v908 = vunpack.c.0.s8 %v907
        %v909 = vlaneseq
        %v910 = vshrl.u32 %v909, 7
        %v911 = vsub.s32 %v908, %v910
        %v912 = vrot.slane %v898, %v911
        %v913 = vcombine.high %v905, %v905
        %v914 = vcombine.high %v912, %v912
        %v915 = vcombine.high %v606, %v606
        %v917 = vunpack.c.l.s4 1983009808
        %v918 = vunpack.c.0.s8 %v917
        %v919 = vlaneseq
        %v920 = vshrl.u32 %v919, 7
        %v921 = vsub.s32 %v918, %v920
        %v922 = vrot.slane %v606, %v921
        %v924 = vunpack.c.l.s4 1983009808
        %v925 = vunpack.c.0.s8 %v924
        %v926 = vlaneseq
        %v927 = vshrl.u32 %v926, 7
        %v928 = vsub.s32 %v925, %v927
        %v929 = vrot.slane %v915, %v928
        %v930 = vcombine.high %v922, %v922
        %v931 = vcombine.high %v929, %v929
        %v933 = vunpack.c.l.s4 1983009808
        %v934 = vunpack.c.0.s8 %v933
        %v935 = vlaneseq
        %v936 = vshrl.u32 %v935, 7
        %v937 = vsub.s32 %v934, %v936
        %v938 = vrot.slane %v607, %v937
        %v939 = vld [vmem:[#allocation6] sm:$0xff]
        %v940 = vld [vmem:[#allocation6 + $0x8] sm:$0xff]
        %v941 = vcombine.low %v646, %v654
        %v942 = vcombine.low %v653, %v655
        %v944 = vunpack.c.l.s4 1983009808
        %v945 = vunpack.c.0.s8 %v944
        %v946 = vlaneseq
        %v947 = vshrl.u32 %v946, 7
        %v948 = vsub.s32 %v945, %v947
        %v949 = vrot.slane %v941, %v948
        %v951 = vunpack.c.l.s4 1983009808
        %v952 = vunpack.c.0.s8 %v951
        %v953 = vlaneseq
        %v954 = vshrl.u32 %v953, 7
        %v955 = vsub.s32 %v952, %v954
        %v956 = vrot.slane %v942, %v955
        %v957 = vcombine.low %v949, %v956
        %v958 = vcombine.low %v663, %v671
        %v959 = vcombine.low %v670, %v672
        %v961 = vunpack.c.l.s4 1983009808
        %v962 = vunpack.c.0.s8 %v961
        %v963 = vlaneseq
        %v964 = vshrl.u32 %v963, 7
        %v965 = vsub.s32 %v962, %v964
        %v966 = vrot.slane %v958, %v965
        %v968 = vunpack.c.l.s4 1983009808
        %v969 = vunpack.c.0.s8 %v968
        %v970 = vlaneseq
        %v971 = vshrl.u32 %v970, 7
        %v972 = vsub.s32 %v969, %v971
        %v973 = vrot.slane %v959, %v972
        %v974 = vcombine.low %v966, %v973
        %v975 = vcombine.low %v680, %v688
        %v976 = vcombine.low %v687, %v689
        %v978 = vunpack.c.l.s4 1983009808
        %v979 = vunpack.c.0.s8 %v978
        %v980 = vlaneseq
        %v981 = vshrl.u32 %v980, 7
        %v982 = vsub.s32 %v979, %v981
        %v983 = vrot.slane %v975, %v982
        %v985 = vunpack.c.l.s4 1983009808
        %v986 = vunpack.c.0.s8 %v985
        %v987 = vlaneseq
        %v988 = vshrl.u32 %v987, 7
        %v989 = vsub.s32 %v986, %v988
        %v990 = vrot.slane %v976, %v989
        %v991 = vcombine.low %v983, %v990
        %v992 = vcombine.low %v697, %v705
        %v993 = vcombine.low %v704, %v706
        %v995 = vunpack.c.l.s4 1983009808
        %v996 = vunpack.c.0.s8 %v995
        %v997 = vlaneseq
        %v998 = vshrl.u32 %v997, 7
        %v999 = vsub.s32 %v996, %v998
        %v1000 = vrot.slane %v992, %v999
        %v1002 = vunpack.c.l.s4 1983009808
        %v1003 = vunpack.c.0.s8 %v1002
        %v1004 = vlaneseq
        %v1005 = vshrl.u32 %v1004, 7
        %v1006 = vsub.s32 %v1003, %v1005
        %v1007 = vrot.slane %v993, %v1006
        %v1008 = vcombine.low %v1000, %v1007
        %v1009 = vcombine.low %v713, %v721
        %v1010 = vcombine.low %v729, %v728
        %v1012 = vunpack.c.l.s4 1983009808
        %v1013 = vunpack.c.0.s8 %v1012
        %v1014 = vlaneseq
        %v1015 = vshrl.u32 %v1014, 7
        %v1016 = vsub.s32 %v1013, %v1015
        %v1017 = vrot.slane %v1009, %v1016
        %v1019 = vunpack.c.l.s4 1983009808
        %v1020 = vunpack.c.0.s8 %v1019
        %v1021 = vlaneseq
        %v1022 = vshrl.u32 %v1021, 7
        %v1023 = vsub.s32 %v1020, %v1022
        %v1024 = vrot.slane %v1010, %v1023
        %v1025 = vcombine.low %v1017, %v1024
        %v1026 = vcombine.low %v730, %v738
        %v1027 = vcombine.low %v746, %v745
        %v1029 = vunpack.c.l.s4 1983009808
        %v1030 = vunpack.c.0.s8 %v1029
        %v1031 = vlaneseq
        %v1032 = vshrl.u32 %v1031, 7
        %v1033 = vsub.s32 %v1030, %v1032
        %v1034 = vrot.slane %v1026, %v1033
        %v1036 = vunpack.c.l.s4 1983009808
        %v1037 = vunpack.c.0.s8 %v1036
        %v1038 = vlaneseq
        %v1039 = vshrl.u32 %v1038, 7
        %v1040 = vsub.s32 %v1037, %v1039
        %v1041 = vrot.slane %v1027, %v1040
        %v1042 = vcombine.low %v1034, %v1041
        %v1043 = vcombine.low %v747, %v755
        %v1044 = vcombine.low %v763, %v762
        %v1046 = vunpack.c.l.s4 1983009808
        %v1047 = vunpack.c.0.s8 %v1046
        %v1048 = vlaneseq
        %v1049 = vshrl.u32 %v1048, 7
        %v1050 = vsub.s32 %v1047, %v1049
        %v1051 = vrot.slane %v1043, %v1050
        %v1053 = vunpack.c.l.s4 1983009808
        %v1054 = vunpack.c.0.s8 %v1053
        %v1055 = vlaneseq
        %v1056 = vshrl.u32 %v1055, 7
        %v1057 = vsub.s32 %v1054, %v1056
        %v1058 = vrot.slane %v1044, %v1057
        %v1059 = vcombine.low %v1051, %v1058
        %v1060 = vcombine.low %v764, %v772
        %v1061 = vcombine.low %v780, %v779
        %v1063 = vunpack.c.l.s4 1983009808
        %v1064 = vunpack.c.0.s8 %v1063
        %v1065 = vlaneseq
        %v1066 = vshrl.u32 %v1065, 7
        %v1067 = vsub.s32 %v1064, %v1066
        %v1068 = vrot.slane %v1060, %v1067
        %v1070 = vunpack.c.l.s4 1983009808
        %v1071 = vunpack.c.0.s8 %v1070
        %v1072 = vlaneseq
        %v1073 = vshrl.u32 %v1072, 7
        %v1074 = vsub.s32 %v1071, %v1073
        %v1075 = vrot.slane %v1061, %v1074
        %v1076 = vcombine.low %v1068, %v1075
        %v1077 = vcombine.low %v781, %v788
        %v1078 = vcombine.low %v796, %v804
        %v1080 = vunpack.c.l.s4 1983009808
        %v1081 = vunpack.c.0.s8 %v1080
        %v1082 = vlaneseq
        %v1083 = vshrl.u32 %v1082, 7
        %v1084 = vsub.s32 %v1081, %v1083
        %v1085 = vrot.slane %v1077, %v1084
        %v1087 = vunpack.c.l.s4 1983009808
        %v1088 = vunpack.c.0.s8 %v1087
        %v1089 = vlaneseq
        %v1090 = vshrl.u32 %v1089, 7
        %v1091 = vsub.s32 %v1088, %v1090
        %v1092 = vrot.slane %v1078, %v1091
        %v1093 = vcombine.low %v1085, %v1092
        %v1094 = vcombine.low %v803, %v805
        %v1095 = vcombine.low %v813, %v821
        %v1097 = vunpack.c.l.s4 1983009808
        %v1098 = vunpack.c.0.s8 %v1097
        %v1099 = vlaneseq
        %v1100 = vshrl.u32 %v1099, 7
        %v1101 = vsub.s32 %v1098, %v1100
        %v1102 = vrot.slane %v1094, %v1101
        %v1104 = vunpack.c.l.s4 1983009808
        %v1105 = vunpack.c.0.s8 %v1104
        %v1106 = vlaneseq
        %v1107 = vshrl.u32 %v1106, 7
        %v1108 = vsub.s32 %v1105, %v1107
        %v1109 = vrot.slane %v1095, %v1108
        %v1110 = vcombine.low %v1102, %v1109
        %v1111 = vcombine.low %v820, %v822
        %v1112 = vcombine.low %v830, %v838
        %v1114 = vunpack.c.l.s4 1983009808
        %v1115 = vunpack.c.0.s8 %v1114
        %v1116 = vlaneseq
        %v1117 = vshrl.u32 %v1116, 7
        %v1118 = vsub.s32 %v1115, %v1117
        %v1119 = vrot.slane %v1111, %v1118
        %v1121 = vunpack.c.l.s4 1983009808
        %v1122 = vunpack.c.0.s8 %v1121
        %v1123 = vlaneseq
        %v1124 = vshrl.u32 %v1123, 7
        %v1125 = vsub.s32 %v1122, %v1124
        %v1126 = vrot.slane %v1112, %v1125
        %v1127 = vcombine.low %v1119, %v1126
        %v1128 = vcombine.low %v837, %v839
        %v1129 = vcombine.low %v847, %v855
        %v1131 = vunpack.c.l.s4 1983009808
        %v1132 = vunpack.c.0.s8 %v1131
        %v1133 = vlaneseq
        %v1134 = vshrl.u32 %v1133, 7
        %v1135 = vsub.s32 %v1132, %v1134
        %v1136 = vrot.slane %v1128, %v1135
        %v1138 = vunpack.c.l.s4 1983009808
        %v1139 = vunpack.c.0.s8 %v1138
        %v1140 = vlaneseq
        %v1141 = vshrl.u32 %v1140, 7
        %v1142 = vsub.s32 %v1139, %v1141
        %v1143 = vrot.slane %v1129, %v1142
        %v1144 = vcombine.low %v1136, %v1143
        %v1145 = vcombine.low %v854, %v856
        %v1146 = vcombine.low %v863, %v871
        %v1148 = vunpack.c.l.s4 1983009808
        %v1149 = vunpack.c.0.s8 %v1148
        %v1150 = vlaneseq
        %v1151 = vshrl.u32 %v1150, 7
        %v1152 = vsub.s32 %v1149, %v1151
        %v1153 = vrot.slane %v1145, %v1152
        %v1155 = vunpack.c.l.s4 1983009808
        %v1156 = vunpack.c.0.s8 %v1155
        %v1157 = vlaneseq
        %v1158 = vshrl.u32 %v1157, 7
        %v1159 = vsub.s32 %v1156, %v1158
        %v1160 = vrot.slane %v1146, %v1159
        %v1161 = vcombine.low %v1153, %v1160
        %v1162 = vcombine.low %v879, %v878
        %v1163 = vcombine.low %v880, %v888
        %v1165 = vunpack.c.l.s4 1983009808
        %v1166 = vunpack.c.0.s8 %v1165
        %v1167 = vlaneseq
        %v1168 = vshrl.u32 %v1167, 7
        %v1169 = vsub.s32 %v1166, %v1168
        %v1170 = vrot.slane %v1162, %v1169
        %v1172 = vunpack.c.l.s4 1983009808
        %v1173 = vunpack.c.0.s8 %v1172
        %v1174 = vlaneseq
        %v1175 = vshrl.u32 %v1174, 7
        %v1176 = vsub.s32 %v1173, %v1175
        %v1177 = vrot.slane %v1163, %v1176
        %v1178 = vcombine.low %v1170, %v1177
        %v1179 = vcombine.low %v896, %v895
        %v1180 = vcombine.low %v897, %v905
        %v1182 = vunpack.c.l.s4 1983009808
        %v1183 = vunpack.c.0.s8 %v1182
        %v1184 = vlaneseq
        %v1185 = vshrl.u32 %v1184, 7
        %v1186 = vsub.s32 %v1183, %v1185
        %v1187 = vrot.slane %v1179, %v1186
        %v1189 = vunpack.c.l.s4 1983009808
        %v1190 = vunpack.c.0.s8 %v1189
        %v1191 = vlaneseq
        %v1192 = vshrl.u32 %v1191, 7
        %v1193 = vsub.s32 %v1190, %v1192
        %v1194 = vrot.slane %v1180, %v1193
        %v1195 = vcombine.low %v1187, %v1194
        %v1196 = vcombine.low %v913, %v912
        %v1197 = vcombine.low %v914, %v922
        %v1199 = vunpack.c.l.s4 1983009808
        %v1200 = vunpack.c.0.s8 %v1199
        %v1201 = vlaneseq
        %v1202 = vshrl.u32 %v1201, 7
        %v1203 = vsub.s32 %v1200, %v1202
        %v1204 = vrot.slane %v1196, %v1203
        %v1206 = vunpack.c.l.s4 1983009808
        %v1207 = vunpack.c.0.s8 %v1206
        %v1208 = vlaneseq
        %v1209 = vshrl.u32 %v1208, 7
        %v1210 = vsub.s32 %v1207, %v1209
        %v1211 = vrot.slane %v1197, %v1210
        %v1212 = vcombine.low %v1204, %v1211
        %v1213 = vcombine.low %v930, %v929
        %v1214 = vcombine.low %v931, %v938
        %v1216 = vunpack.c.l.s4 1983009808
        %v1217 = vunpack.c.0.s8 %v1216
        %v1218 = vlaneseq
        %v1219 = vshrl.u32 %v1218, 7
        %v1220 = vsub.s32 %v1217, %v1219
        %v1221 = vrot.slane %v1213, %v1220
        %v1223 = vunpack.c.l.s4 1983009808
        %v1224 = vunpack.c.0.s8 %v1223
        %v1225 = vlaneseq
        %v1226 = vshrl.u32 %v1225, 7
        %v1227 = vsub.s32 %v1224, %v1226
        %v1228 = vrot.slane %v1214, %v1227
        %v1229 = vcombine.low %v1221, %v1228
        %v1230 = vsel %vm361, %v957, 0
        %v1232 = vsel %vm361, %v974, 0
        %v1234 = vsel %vm361, %v991, 0
        %v1236 = vsel %vm361, %v1008, 0
        %v1238 = vsel %vm361, %v1025, 0
        %v1240 = vsel %vm361, %v1042, 0
        %v1242 = vsel %vm361, %v1059, 0
        %v1244 = vsel %vm361, %v1076, 0
        %v1246 = vsel %vm361, %v1093, 0
        %v1248 = vsel %vm361, %v1110, 0
        %v1250 = vsel %vm361, %v1127, 0
        %v1252 = vsel %vm361, %v1144, 0
        %v1254 = vsel %vm361, %v1161, 0
        %v1256 = vsel %vm361, %v1178, 0
        %v1258 = vsel %vm361, %v1195, 0
        %v1260 = vsel %vm361, %v1212, 0
        %v1262 = vsel %vm361, %v1229, 0
        %1264 = vmatprep.subr.mxu0 0.0
        %1265 = vmatpush1.msra.mxu0 %v939
        %1266 = vmatprep.subr.mxu0 0.0
        %1267 = vmatpush1.msra.mxu0 %v940
        %1268 = vmatprep.subr.mxu0 0.0
        %1269 = vmatpush1.msra.mxu0 0.0
        %1270 = vmatprep.subr.mxu0 0.0
        %1271 = vmatpush1.msra.mxu0 0.0
        %1272 = vmatprep.subr.mxu0 0.0
        %1273 = vmatpush1.msra.mxu0 0.0
        %1274 = vmatprep.subr.mxu0 0.0
        %1275 = vmatpush1.msra.mxu0 0.0
        %1276 = vmatprep.subr.mxu0 0.0
        %1277 = vmatpush1.msra.mxu0 0.0
        %1278 = vmatprep.subr.mxu0 0.0
        %1279 = vmatpush1.msra.mxu0 0.0
        %1280 = vmatprep.subr.mxu0 0.0
        %1281 = vmatpush1.msra.mxu0 0.0
        %1282 = vmatprep.subr.mxu0 0.0
        %1283 = vmatpush1.msra.mxu0 0.0
        %1284 = vmatprep.subr.mxu0 0.0
        %1285 = vmatpush1.msra.mxu0 0.0
        %1286 = vmatprep.subr.mxu0 0.0
        %1287 = vmatpush1.msra.mxu0 0.0
        %1288 = vmatprep.subr.mxu0 0.0
        %1289 = vmatpush1.msra.mxu0 0.0
        %1290 = vmatprep.subr.mxu0 0.0
        %1291 = vmatpush1.msra.mxu0 0.0
        %1292 = vmatprep.subr.mxu0 0.0
        %1293 = vmatpush1.msra.mxu0 0.0
        %1294 = vmatprep.subr.mxu0 0.0
        %1295 = vmatpush1.msra.mxu0 0.0
        %1296 = vmatprep.subr.mxu0 0.0
        %1297 = vmatpush1.msra.mxu0 0.0
        %1298 = vmatprep.subr.mxu0 0.0
        %1299 = vmatpush1.msra.mxu0 0.0
        %1300 = vmatprep.subr.mxu0 0.0
        %1301 = vmatpush1.msra.mxu0 0.0
        %1302 = vmatprep.subr.mxu0 0.0
        %1303 = vmatpush1.msra.mxu0 0.0
        %1304 = vmatprep.subr.mxu0 0.0
        %1305 = vmatpush1.msra.mxu0 0.0
        %1306 = vmatprep.subr.mxu0 0.0
        %1307 = vmatpush1.msra.mxu0 0.0
        %1308 = vmatprep.subr.mxu0 0.0
        %1309 = vmatpush1.msra.mxu0 0.0
        %1310 = vmatprep.subr.mxu0 0.0
        %1311 = vmatpush1.msra.mxu0 0.0
        %1312 = vmatprep.subr.mxu0 0.0
        %1313 = vmatpush1.msra.mxu0 0.0
        %1314 = vmatprep.subr.mxu0 0.0
        %1315 = vmatpush1.msra.mxu0 0.0
        %1316 = vmatprep.subr.mxu0 0.0
        %1317 = vmatpush1.msra.mxu0 0.0
        %1318 = vmatprep.subr.mxu0 0.0
        %1319 = vmatpush1.msra.mxu0 0.0
        %1320 = vmatprep.subr.mxu0 0.0
        %1321 = vmatpush1.msra.mxu0 0.0
        %1322 = vmatprep.subr.mxu0 0.0
        %1323 = vmatpush1.msra.mxu0 0.0
        %1324 = vmatprep.subr.mxu0 0.0
        %1325 = vmatpush1.msra.mxu0 0.0
        %1326 = vmatprep.subr.mxu0 0.0
        %1327 = vmatpush1.msra.mxu0 0.0
        %1328 = vmatprep.mubr.f32.mxu0 0.0
        %1329 = vmatmul.mubr.f32.gmra.mrb[0].mxu0 %v1230
        %v1330 = vpop.f32.mrb[0].mxu0
        %v1331 = vadd.f32 0.0, %v1330
        %v1332 = vpop.f32.mrb[0].mxu0
        %1333 = vmatprep.mubr.f32.mxu0 0.0
        %1334 = vmatmul.mubr.f32.gmra.mrb[0].mxu0 %v1232
        %v1335 = vpop.f32.mrb[0].mxu0
        %v1336 = vadd.f32 0.0, %v1335
        %v1337 = vpop.f32.mrb[0].mxu0
        %1338 = vmatprep.mubr.f32.mxu0 0.0
        %1339 = vmatmul.mubr.f32.gmra.mrb[0].mxu0 %v1234
        %v1340 = vpop.f32.mrb[0].mxu0
        %v1341 = vadd.f32 0.0, %v1340
        %v1342 = vpop.f32.mrb[0].mxu0
        %1343 = vmatprep.mubr.f32.mxu0 0.0
        %1344 = vmatmul.mubr.f32.gmra.mrb[0].mxu0 %v1236
        %v1345 = vpop.f32.mrb[0].mxu0
        %v1346 = vadd.f32 0.0, %v1345
        %v1347 = vpop.f32.mrb[0].mxu0
        %1348 = vmatprep.mubr.f32.mxu0 0.0
        %1349 = vmatmul.mubr.f32.gmra.mrb[0].mxu0 %v1238
        %v1350 = vpop.f32.mrb[0].mxu0
        %v1351 = vadd.f32 0.0, %v1350
        %v1352 = vpop.f32.mrb[0].mxu0
        %1353 = vmatprep.mubr.f32.mxu0 0.0
        %1354 = vmatmul.mubr.f32.gmra.mrb[0].mxu0 %v1240
        %v1355 = vpop.f32.mrb[0].mxu0
        %v1356 = vadd.f32 0.0, %v1355
        %v1357 = vpop.f32.mrb[0].mxu0
        %1358 = vmatprep.mubr.f32.mxu0 0.0
        %1359 = vmatmul.mubr.f32.gmra.mrb[0].mxu0 %v1242
        %v1360 = vpop.f32.mrb[0].mxu0
        %v1361 = vadd.f32 0.0, %v1360
        %v1362 = vpop.f32.mrb[0].mxu0
        %1363 = vmatprep.mubr.f32.mxu0 0.0
        %1364 = vmatmul.mubr.f32.gmra.mrb[0].mxu0 %v1244
        %v1365 = vpop.f32.mrb[0].mxu0
        %v1366 = vadd.f32 0.0, %v1365
        %v1367 = vpop.f32.mrb[0].mxu0
        %1368 = vmatprep.mubr.f32.mxu0 0.0
        %1369 = vmatmul.mubr.f32.gmra.mrb[0].mxu0 %v1246
        %v1370 = vpop.f32.mrb[0].mxu0
        %v1371 = vadd.f32 0.0, %v1370
        %v1372 = vpop.f32.mrb[0].mxu0
        %1373 = vmatprep.mubr.f32.mxu0 0.0
        %1374 = vmatmul.mubr.f32.gmra.mrb[0].mxu0 %v1248
        %v1375 = vpop.f32.mrb[0].mxu0
        %v1376 = vadd.f32 0.0, %v1375
        %v1377 = vpop.f32.mrb[0].mxu0
        %1378 = vmatprep.mubr.f32.mxu0 0.0
        %1379 = vmatmul.mubr.f32.gmra.mrb[0].mxu0 %v1250
        %v1380 = vpop.f32.mrb[0].mxu0
        %v1381 = vadd.f32 0.0, %v1380
        %v1382 = vpop.f32.mrb[0].mxu0
        %1383 = vmatprep.mubr.f32.mxu0 0.0
        %1384 = vmatmul.mubr.f32.gmra.mrb[0].mxu0 %v1252
        %v1385 = vpop.f32.mrb[0].mxu0
        %v1386 = vadd.f32 0.0, %v1385
        %v1387 = vpop.f32.mrb[0].mxu0
        %1388 = vmatprep.mubr.f32.mxu0 0.0
        %1389 = vmatmul.mubr.f32.gmra.mrb[0].mxu0 %v1254
        %v1390 = vpop.f32.mrb[0].mxu0
        %v1391 = vadd.f32 0.0, %v1390
        %v1392 = vpop.f32.mrb[0].mxu0
        %1393 = vmatprep.mubr.f32.mxu0 0.0
        %1394 = vmatmul.mubr.f32.gmra.mrb[0].mxu0 %v1256
        %v1395 = vpop.f32.mrb[0].mxu0
        %v1396 = vadd.f32 0.0, %v1395
        %v1397 = vpop.f32.mrb[0].mxu0
        %1398 = vmatprep.mubr.f32.mxu0 0.0
        %1399 = vmatmul.mubr.f32.gmra.mrb[0].mxu0 %v1258
        %v1400 = vpop.f32.mrb[0].mxu0
        %v1401 = vadd.f32 0.0, %v1400
        %v1402 = vpop.f32.mrb[0].mxu0
        %1403 = vmatprep.mubr.f32.mxu0 0.0
        %1404 = vmatmul.mubr.f32.gmra.mrb[0].mxu0 %v1260
        %v1405 = vpop.f32.mrb[0].mxu0
        %v1406 = vadd.f32 0.0, %v1405
        %v1407 = vpop.f32.mrb[0].mxu0
        %1408 = vmatprep.mubr.f32.mxu0 0.0
        %1409 = vmatmul.mubr.f32.gmra.mrb[0].mxu0 %v1262
        %v1410 = vpop.f32.mrb[0].mxu0
        %v1411 = vadd.f32 0.0, %v1410
        %v1412 = vpop.f32.mrb[0].mxu0
        %1413 = vdwg.mxu0
        %vm1414 = vcmask 277504
        %1415 = vst.msk [vmem:[%s221] sm:$0xff] %vm1414, %v1331
        %1416 = vst.msk [vmem:[%s221 + $0x8] sm:$0xff] %vm1414, %v1336
        %1417 = vst.msk [vmem:[%s221 + $0x10] sm:$0xff] %vm1414, %v1341
        %1418 = vst.msk [vmem:[%s221 + $0x18] sm:$0xff] %vm1414, %v1346
        %1419 = vst.msk [vmem:[%s221 + $0x20] sm:$0xff] %vm1414, %v1351
        %1420 = vst.msk [vmem:[%s221 + $0x28] sm:$0xff] %vm1414, %v1356
        %1421 = vst.msk [vmem:[%s221 + $0x30] sm:$0xff] %vm1414, %v1361
        %1422 = vst.msk [vmem:[%s221 + $0x38] sm:$0xff] %vm1414, %v1366
        %1423 = vst.msk [vmem:[%s221 + $0x40] sm:$0xff] %vm1414, %v1371
        %1424 = vst.msk [vmem:[%s221 + $0x48] sm:$0xff] %vm1414, %v1376
        %1425 = vst.msk [vmem:[%s221 + $0x50] sm:$0xff] %vm1414, %v1381
        %1426 = vst.msk [vmem:[%s221 + $0x58] sm:$0xff] %vm1414, %v1386
        %1427 = vst.msk [vmem:[%s221 + $0x60] sm:$0xff] %vm1414, %v1391
        %1428 = vst.msk [vmem:[%s221 + $0x68] sm:$0xff] %vm1414, %v1396
        %1429 = vst.msk [vmem:[%s221 + $0x70] sm:$0xff] %vm1414, %v1401
        %1430 = vst.msk [vmem:[%s221 + $0x78] sm:$0xff] %vm1414, %v1406
        %1431 = vst.msk [vmem:[%s221 + $0x80] sm:$0xff] %vm1414, %v1411
        %s1432 = smul.u32 17, %s18
        %p1433 = scmp.lt.s32.totalorder %s1432, 33
        %s1434 = scalar_select %p1433, %s1432, 33
        %s1435 = smul.addr %s1434, 8
        %s1436 = scalar_lea.vmem %s3, %s1435
        // Predicated region
        $region45: #{tpu_custom_call.1} parent=31 // pred_check
          %p1437 = pneg %p104
        $region46: #{tpu_custom_call.1} parent=31 // pred_check_branch
          %1439 = sbr.rel (%p1437) target = $region48
        $region47: #{tpu_custom_call.1} parent=31 // pred_region
          %s1440 = smul.u32 17, %s18
        $region48: #{tpu_custom_call.1} parent=31 // pred_fallthru
          _
      $region32: #{tpu_custom_call.1} parent=5 // pred_fallthru
        _
      %p1441 = scmp.le.s32.totalorder 2, %s13
      // Predicated region
      $region49: #{tpu_custom_call.1} parent=5 // pred_check
        %p1442 = pneg %p1441
      $region50: #{tpu_custom_call.1} parent=5 // pred_check_branch
        %1444 = sbr.rel (%p1442) target = $region52
      $region51: #{tpu_custom_call.1} parent=5 // pred_region
        %s1445 = ssub.s32 %s13, 2
        // Predicated region
        $region53: #{tpu_custom_call.1} parent=51 // pred_check
          %p1446 = pneg %p110
        $region54: #{tpu_custom_call.1} parent=51 // pred_check_branch
          %1448 = sbr.rel (%p1446) target = $region56
        $region55: #{tpu_custom_call.1} parent=51 // pred_region
          %s1449 = smul.u32 17, %s19
          %p1450 = scmp.lt.s32.totalorder %s1449, 33
          %s1451 = scalar_select %p1450, %s1449, 33
          %s1452 = smul.addr %s1451, 8
          %s1453 = scalar_lea.vmem %s3, %s1452
        $region56: #{tpu_custom_call.1} parent=51 // pred_fallthru
          _
      $region52: #{tpu_custom_call.1} parent=5 // pred_fallthru
        _
    $region6: #{tpu_custom_call.1} parent=1 // loop_footer
      %s17 = sadd.s32 1, %s13
    $region7: #{tpu_custom_call.1} parent=1 // loop_footer_branch
      %12 = sbr.rel target = $region3
    $region8: #{tpu_custom_call.1} parent=1 // loop_exit
      _
    %1454 = vsyncpa [#allocation3], 1
    %s1455 = scalar_lea.sflag [#allocation3], 1
    %1456 = vsyncpa %s1455, 1
    %1457 = vsyncpa [#allocation5], 1

</llo_original>
